<compile_context>
chip_gen: v5e
topology: v5e:2x2
jax: 0.10.0
libtpu: 0.0.40
codegen_flags: <defaults>
</compile_context>

<pallas_src>
import functools

import jax
import jax.numpy as jnp
from jax.experimental import pallas as pl
from jax.experimental.pallas import tpu as pltpu


_MAX_BLOCK_ROWS = 4096


def _sublane_quantum(dtype) -> int:
    # Sub-32-bit dtypes pack along sublanes: 8 rows (f32), 16 (bf16), 32 (int8/fp8).
    return max(8, 32 // jnp.dtype(dtype).itemsize)


def _vmem_capacity_bytes() -> int:
    """Physical VMEM per TensorCore; conservative fallback if the query fails."""
    try:
        info = pltpu.get_tpu_info()
        cap = getattr(info, "vmem_capacity_bytes", None)
        if cap:
            return int(cap)
    except Exception:
        pass
    return 64 * 1024 * 1024  # v7x per-TC size: the smallest current generation


def _budgets():
    """(tile VMEM budget, Mosaic scoped-vmem limit) per generation."""
    cap = _vmem_capacity_bytes()
    if cap >= 128 * 1024 * 1024:        # v5e / v6e: 128 MiB physical VMEM
        return 40 * 1024 * 1024, 96 * 1024 * 1024
    # v7x: 64 MiB per TensorCore -> keep headroom for double-buffered inputs.
    return 16 * 1024 * 1024, 48 * 1024 * 1024


def _round_down_to(v, q):
    return max(q, v - v % q)


def _pick_block_rows(n, c, x_dtype, y_dtype, tile_budget) -> int:
    quantum = max(_sublane_quantum(x_dtype), _sublane_quantum(y_dtype))
    if n <= quantum:
        return int(n)  # single full-array block (allowed even if not a quantum multiple)
    # Per-row VMEM: 2 pipeline buffers per input + ~6 C-wide f32 intermediates
    # (x_f32, y_f32, xm, exp(xm), y*xm, scratch) on the bf16-input path.
    in_itemsize = jnp.dtype(x_dtype).itemsize + jnp.dtype(y_dtype).itemsize
    per_row = 2 * c * in_itemsize + 6 * c * 4
    block_rows = tile_budget // max(per_row, 1)
    block_rows = max(quantum, min(block_rows, _MAX_BLOCK_ROWS, n))
    # Keep >=2 grid steps so the "parallel" batch axis feeds both v7x TensorCores
    # (near-zero cost on single-TC generations: one extra ~0.35 us grid step).
    if block_rows >= n:
        half = pl.cdiv(n, 2)
        half = ((half + quantum - 1) // quantum) * quantum
        block_rows = min(block_rows, half)
    block_rows = _round_down_to(block_rows, quantum)
    return int(min(block_rows, n))


def _soft_ce_kernel(x_ref, y_ref, loss_ref):
    # x_ref, y_ref: (block_rows, C) tiles in VMEM; loss_ref: (block_rows, 1).
    x = x_ref[...].astype(jnp.float32)
    y = y_ref[...].astype(jnp.float32)

    # Numerically stable log-softmax statistics along the class (lane) axis.
    m = jnp.max(x, axis=-1, keepdims=True)                          # (tb, 1)
    xm = x - m                                                      # (tb, C), <= 0
    lse = jnp.log(jnp.sum(jnp.exp(xm), axis=-1, keepdims=True))     # (tb, 1)

    # loss = sum(-y * (xm - lse)) = lse * sum(y) - sum(y * xm)
    # (explicit sum(y): soft targets need not be normalized).
    s_y = jnp.sum(y, axis=-1, keepdims=True)                        # (tb, 1)
    s_yxm = jnp.sum(y * xm, axis=-1, keepdims=True)                 # (tb, 1)
    loss_ref[...] = lse * s_y - s_yxm


@functools.partial(jax.jit, static_argnames=("reduction", "block_rows"))
def soft_target_cross_entropy(x, y, reduction="mean", block_rows=None):
    """loss = sum(-y * log_softmax(x, -1), -1); optional mean over the batch."""
    assert x.shape == y.shape and x.ndim == 2
    n, c = x.shape
    tile_budget, vmem_limit = _budgets()

    quantum = max(_sublane_quantum(x.dtype), _sublane_quantum(y.dtype))
    if block_rows is None:
        block_rows = _pick_block_rows(n, c, x.dtype, y.dtype, tile_budget)
    else:
        # Validate user-supplied block_rows against the sublane quantum.
        block_rows = int(block_rows)
        if block_rows >= n:
            block_rows = n
        else:
            block_rows = min(_round_down_to(block_rows, quantum), n)

    num_blocks = pl.cdiv(n, block_rows)
    bytes_accessed = n * c * (x.dtype.itemsize + y.dtype.itemsize) + n * 4

    per_row = pl.pallas_call(
        _soft_ce_kernel,
        out_shape=jax.ShapeDtypeStruct((n, 1), jnp.float32),
        grid_spec=pltpu.PrefetchScalarGridSpec(
            num_scalar_prefetch=0,
            grid=(num_blocks,),
            in_specs=[
                pl.BlockSpec((block_rows, c), lambda i: (i, 0)),
                pl.BlockSpec((block_rows, c), lambda i: (i, 0)),
            ],
            out_specs=pl.BlockSpec((block_rows, 1), lambda i: (i, 0)),
        ),
        compiler_params=pltpu.CompilerParams(
            # Batch axis is trivially parallel -> shards across v7x's 2 TensorCores.
            dimension_semantics=("parallel",),
            vmem_limit_bytes=vmem_limit,
        ),
        cost_estimate=pl.CostEstimate(
            flops=5 * n * c,
            transcendentals=n * c + n,
            bytes_accessed=bytes_accessed,
        ),
    )(x, y)

    loss = per_row[:, 0]  # (N,)
    if reduction == "mean":
        return jnp.mean(loss)
    elif reduction == "none":
        return loss
    else:
        raise NotImplementedError


if __name__ == "__main__":
    key = jax.random.PRNGKey(0)
    k1, k2, k3, k4, k5, k6 = jax.random.split(key, 6)

    # Small shapes consistent with a classification head: batch=16, classes=32.
    N, C = 16, 32
    x = jax.random.normal(k1, (N, C), dtype=jnp.float32)
    y = jax.nn.softmax(jax.random.normal(k2, (N, C), dtype=jnp.float32), axis=-1)

    loss_mean = soft_target_cross_entropy(x, y, reduction="mean")
    loss_none = soft_target_cross_entropy(x, y, reduction="none")
    jax.block_until_ready((loss_mean, loss_none))

    ref = jnp.sum(-y * jax.nn.log_softmax(x, axis=-1), axis=-1)
    assert jnp.allclose(loss_none, ref, rtol=1e-5, atol=1e-5)
    assert jnp.allclose(loss_mean, jnp.mean(ref), rtol=1e-5, atol=1e-5)

    # Multi-block grid with a partial (unpadded) tail block + unnormalized targets.
    N2, C2 = 200, 256
    x2 = jax.random.normal(k3, (N2, C2), dtype=jnp.float32)
    y2 = 0.7 * jax.nn.softmax(jax.random.normal(k4, (N2, C2), dtype=jnp.float32), -1)
    loss2 = soft_target_cross_entropy(x2, y2, reduction="none", block_rows=64)
    jax.block_until_ready(loss2)
    ref2 = jnp.sum(-y2 * jax.nn.log_softmax(x2, axis=-1), axis=-1)
    assert jnp.allclose(loss2, ref2, rtol=1e-5, atol=1e-5)

    # bf16 inputs streamed as bf16 (upcast to f32 only inside VMEM); 16-row quantum.
    N3, C3 = 48, 128
    x3 = jax.random.normal(k5, (N3, C3), dtype=jnp.float32).astype(jnp.bfloat16)
    y3 = jax.nn.softmax(jax.random.normal(k6, (N3, C3), dtype=jnp.float32), -1)
    y3 = y3.astype(jnp.bfloat16)
    loss3 = soft_target_cross_entropy(x3, y3, reduction="none")
    jax.block_until_ready(loss3)
    x3f, y3f = x3.astype(jnp.float32), y3.astype(jnp.float32)
    ref3 = jnp.sum(-y3f * jax.nn.log_softmax(x3f, axis=-1), axis=-1)
    assert jnp.allclose(loss3, ref3, rtol=1e-4, atol=1e-4)

    print("KERNEL_OK")
</pallas_src>

<mosaic_0001>
module attributes {stable_mosaic.version = 11 : i64} {
  func.func @_soft_ce_kernel(%arg0: i32, %arg1: memref<8x32xf32, #tpu.memory_space<vmem>>, %arg2: memref<8x32xf32, #tpu.memory_space<vmem>>, %arg3: memref<8x1xf32, #tpu.memory_space<vmem>>) attributes {dimension_semantics = [#tpu.dimension_semantics<parallel>], iteration_bounds = array<i64: 2>, scalar_prefetch = 0 : i64, scratch_operands = 0 : i64, tpu.core_type = #tpu.core_type<tc>, window_params = [{transform_indices = @transform_0, window_bounds = array<i64: 8, 32>}, {transform_indices = @transform_1, window_bounds = array<i64: 8, 32>}, {transform_indices = @transform_2, window_bounds = array<i64: 8, 1>}]} {
    %c0 = arith.constant 0 : index
    %c0_0 = arith.constant 0 : index
    %0 = vector.load %arg1[%c0, %c0_0] : memref<8x32xf32, #tpu.memory_space<vmem>>, vector<8x32xf32>
    %c0_1 = arith.constant 0 : index
    %c0_2 = arith.constant 0 : index
    %1 = vector.load %arg2[%c0_1, %c0_2] : memref<8x32xf32, #tpu.memory_space<vmem>>, vector<8x32xf32>
    %cst = arith.constant dense<0xFF800000> : vector<8xf32>
    %2 = vector.multi_reduction <maximumf>, %0, %cst [1] : vector<8x32xf32> to vector<8xf32>
    %3 = vector.shape_cast %2 : vector<8xf32> to vector<8x1xf32>
    %4 = vector.broadcast %3 : vector<8x1xf32> to vector<8x32xf32>
    %5 = arith.subf %0, %4 : vector<8x32xf32>
    %6 = math.exp %5 : vector<8x32xf32>
    %cst_3 = arith.constant dense<0.000000e+00> : vector<8xf32>
    %7 = vector.multi_reduction <add>, %6, %cst_3 [1] : vector<8x32xf32> to vector<8xf32>
    %8 = vector.shape_cast %7 : vector<8xf32> to vector<8x1xf32>
    %9 = math.log %8 : vector<8x1xf32>
    %cst_4 = arith.constant dense<0.000000e+00> : vector<8xf32>
    %10 = vector.multi_reduction <add>, %1, %cst_4 [1] : vector<8x32xf32> to vector<8xf32>
    %11 = vector.shape_cast %10 : vector<8xf32> to vector<8x1xf32>
    %12 = arith.mulf %1, %5 : vector<8x32xf32>
    %cst_5 = arith.constant dense<0.000000e+00> : vector<8xf32>
    %13 = vector.multi_reduction <add>, %12, %cst_5 [1] : vector<8x32xf32> to vector<8xf32>
    %14 = vector.shape_cast %13 : vector<8xf32> to vector<8x1xf32>
    %15 = arith.mulf %9, %11 : vector<8x1xf32>
    %16 = arith.subf %15, %14 : vector<8x1xf32>
    %c0_6 = arith.constant 0 : index
    %c0_7 = arith.constant 0 : index
    %17 = vector.load %arg3[%c0_6, %c0_7] : memref<8x1xf32, #tpu.memory_space<vmem>>, vector<8x1xf32>
    tpu.vector_store %arg3[%c0_6, %c0_7], %16 {strides = array<i32>} : memref<8x1xf32, #tpu.memory_space<vmem>>, vector<8x1xf32>,
    return
  }
  func.func @transform_0(%arg0: i32) -> (i32, i32) {
    %c0_i32 = arith.constant 0 : i32
    %c0_i32_0 = arith.constant 0 : i32
    return %arg0, %c0_i32 : i32, i32
  }
  func.func @transform_1(%arg0: i32) -> (i32, i32) {
    %c0_i32 = arith.constant 0 : i32
    %c0_i32_0 = arith.constant 0 : i32
    return %arg0, %c0_i32 : i32, i32
  }
  func.func @transform_2(%arg0: i32) -> (i32, i32) {
    %c0_i32 = arith.constant 0 : i32
    %c0_i32_0 = arith.constant 0 : i32
    return %arg0, %c0_i32 : i32, i32
  }
}

</mosaic_0001>

<llo_original>
// kernel: soft_target_cross_entropy.1
$region0: #{soft_target_cross_entropy.1}
  #allocation0 [shape = 'u32[]', space=smem, size = 0x4, offset = 0x4, fixed_abs, tag = 'smem constant byte address 0x4 - core index']
  #allocation1 [shape = 'u32[72,128]{1,0:T(1,128)}', space=vmem, size = 0x9000, scoped, tag = 'internal scratch']
  %s0 = inlined_call_operand.hbm [shape: f32[16,32], index: 0, kind: input, shape index: {}]
  %s1 = inlined_call_operand.hbm [shape: f32[16,32], index: 1, kind: input, shape index: {}]
  %s2 = inlined_call_operand.vmem [shape: f32[16,1], index: 2, kind: output, shape index: {}]
  %s3 = sld [smem:[#allocation0]]
  $region49: #{soft_target_cross_entropy.1} parent=0
    _
  %s5 = ssub.s32 1, %s3
  %s6 = scalar_select 0, %s5, %s3
  $region1: #{soft_target_cross_entropy.1} parent=0
    #allocation2 [shape = 'u8[8192]{0}', space=vmem, size = 0x2000, scoped, tag = 'input window, operand 0']
    #allocation3 [shape = 's32[2]{0}', space=sflag, size = 0x8, scoped, tag = 'scoped memory for soft_target_cross_entropy.1']
    #allocation4 [shape = 'u8[8192]{0}', space=vmem, size = 0x2000, scoped, tag = 'input window, operand 1']
    #allocation5 [shape = 's32[2]{0}', space=sflag, size = 0x8, scoped, tag = 'scoped memory for soft_target_cross_entropy.1']
    %7 = vsyncpa [#allocation3], 0
    %s8 = scalar_lea.sflag [#allocation3], 1
    %9 = vsyncpa %s8, 0
    %10 = vsyncpa [#allocation5], 0
    %s11 = scalar_lea.sflag [#allocation5], 1
    %12 = vsyncpa %s11, 0
    loop: start=0, step=1, limit=4
    $region2: #{soft_target_cross_entropy.1} parent=1 // loop_pre_header
      _
    $region3: #{soft_target_cross_entropy.1} parent=1 // loop_header
      %s14 = sphi 0, %s18
      %p15 = scmp.ge.s32.totalorder %s14, 4
      %s24 = sphi 0, %s26
      %s27 = sphi 0, %s24
      %s28 = sphi 0, %s27
      %s44 = sphi 0, %s28
      %s50 = sphi 0, %s52
      %s53 = sphi 0, %s50
      %s54 = sphi 0, %s53
      %s70 = sphi 0, %s54
      %s76 = sphi 0, %s78
      %s79 = sphi 0, %s76
      %s80 = sphi 0, %s79
      %s96 = sphi 0, %s80
    $region4: #{soft_target_cross_entropy.1} parent=1 // loop_header_branch
      %17 = sbr.rel (%p15) target = $region8
    $region5: #{soft_target_cross_entropy.1} parent=1 // loop_body
      %s19 = ssub.s32 %s14, 1
      %s20 = ssub.s32 %s14, 2
      %s21 = sadd.s32 %s14, 1
      %s22 = ssub.s32 %s14, %s21
      %p23 = scmp.eq.s32.totalorder %s22, 0
      %s25 = sadd.s32 %s24, 1
      %s26 = scalar_select %p23, %s24, %s25
      %p29 = pneg %p23
      %p30 = scmp.eq.s32.totalorder %s14, 1
      %p31 = por %p29, %p30
      %p32 = scmp.ne.s32.totalorder %s24, %s27
      %p33 = scmp.eq.s32.totalorder %s14, 0
      %p34 = por %p32, %p33
      %p35 = scmp.ne.s32.totalorder %s24, %s27
      %p36 = scmp.eq.s32.totalorder %s19, 1
      %p37 = por %p35, %p36
      %p38 = scmp.ne.s32.totalorder %s27, %s28
      %p39 = scmp.eq.s32.totalorder %s19, 0
      %p40 = por %p38, %p39
      %p41 = scmp.ne.s32.totalorder %s27, %s28
      %p42 = scmp.eq.s32.totalorder %s20, 1
      %p43 = por %p41, %p42
      %p45 = scmp.ne.s32.totalorder %s28, %s44
      %p46 = scmp.eq.s32.totalorder %s20, 0
      %p47 = por %p45, %p46
      %s48 = ssub.s32 %s14, %s21
      %p49 = scmp.eq.s32.totalorder %s48, 0
      %s51 = sadd.s32 %s50, 1
      %s52 = scalar_select %p49, %s50, %s51
      %p55 = pneg %p49
      %p56 = scmp.eq.s32.totalorder %s14, 1
      %p57 = por %p55, %p56
      %p58 = scmp.ne.s32.totalorder %s50, %s53
      %p59 = scmp.eq.s32.totalorder %s14, 0
      %p60 = por %p58, %p59
      %p61 = scmp.ne.s32.totalorder %s50, %s53
      %p62 = scmp.eq.s32.totalorder %s19, 1
      %p63 = por %p61, %p62
      %p64 = scmp.ne.s32.totalorder %s53, %s54
      %p65 = scmp.eq.s32.totalorder %s19, 0
      %p66 = por %p64, %p65
      %p67 = scmp.ne.s32.totalorder %s53, %s54
      %p68 = scmp.eq.s32.totalorder %s20, 1
      %p69 = por %p67, %p68
      %p71 = scmp.ne.s32.totalorder %s54, %s70
      %p72 = scmp.eq.s32.totalorder %s20, 0
      %p73 = por %p71, %p72
      %s74 = ssub.s32 %s14, %s21
      %p75 = scmp.eq.s32.totalorder %s74, 0
      %s77 = sadd.s32 %s76, 1
      %s78 = scalar_select %p75, %s76, %s77
      %p81 = pneg %p75
      %p82 = scmp.eq.s32.totalorder %s14, 1
      %p83 = por %p81, %p82
      %p84 = scmp.ne.s32.totalorder %s76, %s79
      %p85 = scmp.eq.s32.totalorder %s14, 0
      %p86 = por %p84, %p85
      %p87 = scmp.ne.s32.totalorder %s76, %s79
      %p88 = scmp.eq.s32.totalorder %s19, 1
      %p89 = por %p87, %p88
      %p90 = scmp.ne.s32.totalorder %s79, %s80
      %p91 = scmp.eq.s32.totalorder %s19, 0
      %p92 = por %p90, %p91
      %p93 = scmp.ne.s32.totalorder %s79, %s80
      %p94 = scmp.eq.s32.totalorder %s20, 1
      %p95 = por %p93, %p94
      %p97 = scmp.ne.s32.totalorder %s80, %s96
      %p98 = scmp.eq.s32.totalorder %s20, 0
      %p99 = por %p97, %p98
      %p100 = scmp.le.s32.totalorder 1, %s14
      %p101 = scmp.lt.s32.totalorder %s14, 3
      %p102 = pnand %p100, %p101
      %p103 = pneg %p102
      // Predicated region
      $region9: #{soft_target_cross_entropy.1} parent=5 // pred_check
        _
      $region10: #{soft_target_cross_entropy.1} parent=5 // pred_check_branch
        %105 = sbr.rel (%p102) target = $region12
      $region11: #{soft_target_cross_entropy.1} parent=5 // pred_region
        %s106 = ssub.s32 %s14, 1
      $region12: #{soft_target_cross_entropy.1} parent=5 // pred_fallthru
        _
      %p107 = scmp.lt.s32.totalorder %s14, 2
      // Predicated region
      $region13: #{soft_target_cross_entropy.1} parent=5 // pred_check
        %p108 = pneg %p107
      $region14: #{soft_target_cross_entropy.1} parent=5 // pred_check_branch
        %110 = sbr.rel (%p108) target = $region16
      $region15: #{soft_target_cross_entropy.1} parent=5 // pred_region
        // Predicated region
        $region17: #{soft_target_cross_entropy.1} parent=15 // pred_check
          %p111 = pneg %p34
        $region18: #{soft_target_cross_entropy.1} parent=15 // pred_check_branch
          %113 = sbr.rel (%p111) target = $region20
        $region19: #{soft_target_cross_entropy.1} parent=15 // pred_region
          %s114 = sand.u32 %s24, 1
          %s115 = scalar_lea.sflag [#allocation3], %s114
          %s116 = sand.u32 %s24, 1
          %s117 = smul.addr %s116, 8
          %s118 = scalar_lea.vmem [#allocation2], %s117
          %120 = vsyncadd %s115, 0
          %s121 = smul.addr %s14, 8
          %s122 = scalar_lea.hbm %s0, %s121
          %s124 = sshll.u32 %s122, 4
          %s125 = int_to_ptr.hbm [resolvable:$true] %s124
          %s126 = sshll.u32 %s118, 4
          %s127 = int_to_ptr.vmem [resolvable:$true] %s126
          %129 = dma.hbm_to_vmem [thread:$0]  %s125, 128, %s127, %s115
        $region20: #{soft_target_cross_entropy.1} parent=15 // pred_fallthru
          _
        // Predicated region
        $region21: #{soft_target_cross_entropy.1} parent=15 // pred_check
          %p130 = pneg %p60
        $region22: #{soft_target_cross_entropy.1} parent=15 // pred_check_branch
          %132 = sbr.rel (%p130) target = $region24
        $region23: #{soft_target_cross_entropy.1} parent=15 // pred_region
          %s133 = sand.u32 %s50, 1
          %s134 = scalar_lea.sflag [#allocation5], %s133
          %s135 = sand.u32 %s50, 1
          %s136 = smul.addr %s135, 8
          %s137 = scalar_lea.vmem [#allocation4], %s136
          %139 = vsyncadd %s134, 0
          %s140 = smul.addr %s14, 8
          %s141 = scalar_lea.hbm %s1, %s140
          %s143 = sshll.u32 %s141, 4
          %s144 = int_to_ptr.hbm [resolvable:$true] %s143
          %s145 = sshll.u32 %s137, 4
          %s146 = int_to_ptr.vmem [resolvable:$true] %s145
          %148 = dma.hbm_to_vmem [thread:$0]  %s144, 128, %s146, %s134
        $region24: #{soft_target_cross_entropy.1} parent=15 // pred_fallthru
          _
      $region16: #{soft_target_cross_entropy.1} parent=5 // pred_fallthru
        _
      %p149 = scmp.le.s32.totalorder 1, %s14
      %p150 = scmp.lt.s32.totalorder %s14, 3
      %p151 = pnand %p149, %p150
      %p152 = pneg %p151
      // Predicated region
      $region25: #{soft_target_cross_entropy.1} parent=5 // pred_check
        _
      $region26: #{soft_target_cross_entropy.1} parent=5 // pred_check_branch
        %154 = sbr.rel (%p151) target = $region28
      $region27: #{soft_target_cross_entropy.1} parent=5 // pred_region
        %s155 = ssub.s32 %s14, 1
        %s156 = sand.u32 %s27, 1
        %s157 = scalar_lea.sflag [#allocation3], %s156
        %s158 = sand.u32 %s27, 1
        %s159 = smul.addr %s158, 8
        %s160 = scalar_lea.vmem [#allocation2], %s159
        // Predicated region
        $region29: #{soft_target_cross_entropy.1} parent=27 // pred_check
          %p161 = pneg %p40
        $region30: #{soft_target_cross_entropy.1} parent=27 // pred_check_branch
          %163 = sbr.rel (%p161) target = $region32
        $region31: #{soft_target_cross_entropy.1} parent=27 // pred_region
          %165 = dma.done %s157, 128
        $region32: #{soft_target_cross_entropy.1} parent=27 // pred_fallthru
          _
        %s166 = sand.u32 %s53, 1
        %s167 = scalar_lea.sflag [#allocation5], %s166
        %s168 = sand.u32 %s53, 1
        %s169 = smul.addr %s168, 8
        %s170 = scalar_lea.vmem [#allocation4], %s169
        // Predicated region
        $region33: #{soft_target_cross_entropy.1} parent=27 // pred_check
          %p171 = pneg %p66
        $region34: #{soft_target_cross_entropy.1} parent=27 // pred_check_branch
          %173 = sbr.rel (%p171) target = $region36
        $region35: #{soft_target_cross_entropy.1} parent=27 // pred_region
          %175 = dma.done %s167, 128
        $region36: #{soft_target_cross_entropy.1} parent=27 // pred_fallthru
          _
        %s176 = sand.u32 %s27, 1
        %s177 = scalar_lea.sflag [#allocation3], %s176
        %s178 = sand.u32 %s27, 1
        %s179 = smul.addr %s178, 8
        %s180 = scalar_lea.vmem [#allocation2], %s179
        %p181 = pneg %p40
        %p182 = pneg %p37
        %s183 = sand.u32 %s53, 1
        %s184 = scalar_lea.sflag [#allocation5], %s183
        %s185 = sand.u32 %s53, 1
        %s186 = smul.addr %s185, 8
        %s187 = scalar_lea.vmem [#allocation4], %s186
        %p188 = pneg %p66
        %p189 = pneg %p63
        %p190 = pneg %p92
        %p191 = pneg %p89
        %p192 = scmp.lt.s32.totalorder %s19, 1
        %s193 = scalar_select %p192, %s19, 1
        %s194 = smul.addr %s193, 8
        %s195 = scalar_lea.vmem %s2, %s194
        %p196 = scmp.lt.s32.totalorder %s19, 1
        %s197 = scalar_select %p196, %s19, 1
        %s198 = smul.addr %s197, 8
        %s199 = scalar_lea.vmem %s2, %s198
        %v200 = vld [vmem:[%s160] sm:$0xff]
        %v201 = vld [vmem:[%s170] sm:$0xff]
        %vm202 = vcmask 261120
        %v203 = vsel %vm202, %v200, -inf
        %204 = vmax.xlane.f32.xlu0 %v203
        %v205 = vpop.xlane.xlu0 %204
        %v206 = vsub.f32 %v200, %v205
        %v207 = vmul.f32 %v206, 1.442695
        %v208 = vpow.pop %v207
        %v209 = vsel %vm202, %v208, 0.0
        %210 = vadd.xlane.f32.xlu0 %v209
        %v211 = vpop.xlane.xlu0 %210
        %v212 = vlog2.pop %v211
        %v213 = vmul.f32 %v212, 0.6931472
        %v214 = vsel %vm202, %v201, 0.0
        %215 = vadd.xlane.f32.xlu0 %v214
        %v216 = vpop.xlane.xlu0 %215
        %v217 = vmul.f32 %v201, %v206
        %v218 = vsel %vm202, %v217, 0.0
        %219 = vadd.xlane.f32.xlu0 %v218
        %v220 = vpop.xlane.xlu0 %219
        %v221 = vmul.f32 %v213, %v216
        %v222 = vsub.f32 %v221, %v220
        %vm223 = vcmask 7168
        %224 = vst.msk [vmem:[%s199] sm:$0xff] %vm223, %v222
        %p225 = scmp.lt.s32.totalorder %s19, 1
        %s226 = scalar_select %p225, %s19, 1
        %s227 = smul.addr %s226, 8
        %s228 = scalar_lea.vmem %s2, %s227
        // Predicated region
        $region37: #{soft_target_cross_entropy.1} parent=27 // pred_check
          %p229 = pneg %p89
        $region38: #{soft_target_cross_entropy.1} parent=27 // pred_check_branch
          %231 = sbr.rel (%p229) target = $region40
        $region39: #{soft_target_cross_entropy.1} parent=27 // pred_region
          _
        $region40: #{soft_target_cross_entropy.1} parent=27 // pred_fallthru
          _
      $region28: #{soft_target_cross_entropy.1} parent=5 // pred_fallthru
        _
      %p232 = scmp.le.s32.totalorder 2, %s14
      // Predicated region
      $region41: #{soft_target_cross_entropy.1} parent=5 // pred_check
        %p233 = pneg %p232
      $region42: #{soft_target_cross_entropy.1} parent=5 // pred_check_branch
        %235 = sbr.rel (%p233) target = $region44
      $region43: #{soft_target_cross_entropy.1} parent=5 // pred_region
        %s236 = ssub.s32 %s14, 2
        // Predicated region
        $region45: #{soft_target_cross_entropy.1} parent=43 // pred_check
          %p237 = pneg %p95
        $region46: #{soft_target_cross_entropy.1} parent=43 // pred_check_branch
          %239 = sbr.rel (%p237) target = $region48
        $region47: #{soft_target_cross_entropy.1} parent=43 // pred_region
          %p240 = scmp.lt.s32.totalorder %s20, 1
          %s241 = scalar_select %p240, %s20, 1
          %s242 = smul.addr %s241, 8
          %s243 = scalar_lea.vmem %s2, %s242
        $region48: #{soft_target_cross_entropy.1} parent=43 // pred_fallthru
          _
      $region44: #{soft_target_cross_entropy.1} parent=5 // pred_fallthru
        _
    $region6: #{soft_target_cross_entropy.1} parent=1 // loop_footer
      %s18 = sadd.s32 1, %s14
    $region7: #{soft_target_cross_entropy.1} parent=1 // loop_footer_branch
      %13 = sbr.rel target = $region3
    $region8: #{soft_target_cross_entropy.1} parent=1 // loop_exit
      _
    %244 = vsyncpa [#allocation3], 1
    %s245 = scalar_lea.sflag [#allocation3], 1
    %246 = vsyncpa %s245, 1
    %247 = vsyncpa [#allocation5], 1
    %s248 = scalar_lea.sflag [#allocation5], 1
    %249 = vsyncpa %s248, 1

</llo_original>
